<compile_context>
chip_gen: v6e
topology: v6e:2x2x1
jax: 0.10.0
libtpu: 0.0.40
codegen_flags: <defaults>
</compile_context>

<pallas_src>
import jax
import jax.numpy as jnp
from jax.experimental import pallas as pl
from jax.experimental.pallas import tpu as pltpu

NEG_SLOPE = 0.01  # PyTorch F.leaky_relu default negative_slope
LANE = 128
SUBLANE = 8


def _round_up(x, mult):
    return ((x + mult - 1) // mult) * mult


def _chip_info():
    """(tensorcores_per_chip, vmem_capacity_bytes) with conservative fallbacks."""
    num_cores = 1
    vmem_bytes = 64 * 1024 * 1024  # conservative (v7x) default
    try:
        info = pltpu.get_tpu_info()
        vmem_bytes = int(getattr(info, "vmem_capacity_bytes", vmem_bytes))
        for attr in ("num_tensorcores", "tensorcores_per_chip", "num_cores",
                     "cores_per_chip"):
            v = getattr(info, attr, None)
            if v:
                num_cores = int(v)
                break
    except Exception:
        pass
    return num_cores, vmem_bytes


def prepare_params(params, compute_dtype=jnp.bfloat16):
    """One-time parameter preparation (casts + lane padding), outside the hot path.

    * Hidden widths are zero-padded to multiples of 128 so intermediate
      activations are lane-dense; the next layer's K rows are zero-padded to
      match, so results for the real columns are exactly unchanged.
    * Weights are pre-cast to `compute_dtype` (native MXU operands, half the
      weight DMA); biases to f32 (added into the f32 accumulator).
    * The output head keeps its true column count (no 128 pad) to avoid a
      16x-inflated f32 writeback for small out_size.
    """
    hidden = params["hidden"]
    w_out = params["out"]

    prepped_hidden = []
    k_pad = hidden[0][0].shape[0] if hidden else w_out.shape[0]
    for (w, b) in hidden:
        k, n = w.shape
        n_pad = _round_up(n, LANE)
        w_p = jnp.zeros((k_pad, n_pad), compute_dtype).at[:k, :n].set(
            w.astype(compute_dtype))
        b_p = jnp.zeros((1, n_pad), jnp.float32).at[:, :n].set(
            b.astype(jnp.float32))
        prepped_hidden.append((w_p, b_p))
        k_pad = n_pad

    k, n = w_out.shape
    w_out_p = jnp.zeros((k_pad, n), compute_dtype).at[:k, :].set(
        w_out.astype(compute_dtype))

    # TODO(synk): for deep MLPs, fold/concatenate the biases into a single
    # buffer (or an extra weight row) to shave a few DMA descriptors per step.
    return {
        "hidden": prepped_hidden,
        "out": w_out_p,
        "out_size": n,
        "compute_dtype": compute_dtype,
    }


def _make_mlp_kernel(num_hidden, compute_dtype):
    """Fused {affine - leaky_relu - [dropout]} x L + affine (no bias).

    Ref order: x, (w_0, b_0), ..., (w_{L-1}, b_{L-1}), w_out, out.
    """

    def kernel(*refs):
        x_ref = refs[0]
        o_ref = refs[-1]
        # Cast the native-dtype input tile in-kernel (VPU op, hides under DMA
        # slack) instead of a separate XLA cast pre-pass.
        h = x_ref[...].astype(compute_dtype)
        for l in range(num_hidden):
            w = refs[1 + 2 * l][...]
            b = refs[2 + 2 * l][...]
            # bf16 x bf16 -> f32 accumulate on the MXU.
            acc = jnp.dot(h, w, preferred_element_type=jnp.float32) + b
            # leaky ReLU in f32 on the VPU (v5e has no bf16 VALU).
            acc = jnp.where(acc > 0, acc, NEG_SLOPE * acc)
            # TODO(synk): dropout_rate > 0 in train mode would need
            # pltpu.prng_seed / prng_random_bits masking + 1/(1-p) rescale;
            # with dropout_rate=0.0 (or eval mode) dropout is the identity.
            h = acc.astype(compute_dtype)
        w_out = refs[1 + 2 * num_hidden][...]
        o_ref[...] = jnp.dot(
            h, w_out, preferred_element_type=jnp.float32
        ).astype(o_ref.dtype)

    return kernel


def fcnn_policy_forward(x, prepped, *, tm=512):
    """Forward pass of FCNNPolicy.

    Args:
      x: array of shape (b, q) or (b, t, q) with q == input_size.
      prepped: output of prepare_params (pre-cast, lane-padded weights).
      tm: maximum row-tile size (rows are zero-padded to a tile multiple).

    Returns:
      array of shape x.shape[:-1] + (out_size,), dtype of x.
    """
    hidden = prepped["hidden"]
    w_out = prepped["out"]
    out_size = prepped["out_size"]
    compute_dtype = prepped["compute_dtype"]
    num_hidden = len(hidden)

    lead = x.shape[:-1]
    q = x.shape[-1]
    m = 1
    for d in lead:
        m *= d

    num_cores, vmem_cap = _chip_info()

    # Row tiling: big tiles amortize the ~0.35us/grid-step overhead and fill
    # the MXU M dimension.  Only force grid >= 2 on multi-TensorCore chips
    # (v7x, sharded via dimension_semantics=("parallel",)); on v5e/v6e the
    # split is pure per-step overhead.
    m8 = _round_up(m, SUBLANE)
    tm = min(_round_up(max(tm, SUBLANE), SUBLANE), m8)
    if num_cores >= 2 and m8 > SUBLANE and pl.cdiv(m8, tm) < 2:
        tm = max(SUBLANE, _round_up(pl.cdiv(m8, 2), SUBLANE))
    m_pad = _round_up(m8, tm)
    grid_m = m_pad // tm

    # Only a zero row-pad; the dtype cast happens inside the kernel.
    x2 = x.reshape(m, q)
    if m_pad != m:
        x2 = jnp.pad(x2, ((0, m_pad - m), (0, 0)))

    flat_args = [x2]
    for (w, b) in hidden:
        flat_args.extend([w, b])
    flat_args.append(w_out)

    widest = max([q, out_size] + [w.shape[1] for (w, _) in hidden])

    def _nbytes(shape, dtype):
        n = 1
        for d in shape:
            n *= d
        return n * jnp.dtype(dtype).itemsize

    def _build_call(single_buffer_params):
        def _param_spec(shape):
            # TODO(synk): for very wide hidden layers on v7x (64 MiB VMEM),
            # stream weights over an extra "arbitrary" K/N grid axis with
            # 256-aligned tiles instead of keeping full weights resident.
            if single_buffer_params:
                # Grid-invariant blocks: a second pipeline buffer is pure
                # VMEM waste -> single-buffer them.
                return pl.BlockSpec(shape, lambda i: (0, 0),
                                    pipeline_mode=pl.Buffered(1))
            return pl.BlockSpec(shape, lambda i: (0, 0))

        in_specs = [pl.BlockSpec((tm, q), lambda i: (i, 0))]
        for (w, b) in hidden:
            in_specs.append(_param_spec(w.shape))
            in_specs.append(_param_spec(b.shape))
        in_specs.append(_param_spec(w_out.shape))

        # VMEM budget: double-buffered x/out blocks, params x buffer count,
        # plus slack for the f32 intermediate activations.  Cap chip-aware.
        pfac = 1 if single_buffer_params else 2
        need = 2 * _nbytes((tm, q), x.dtype)
        for (w, b) in hidden:
            need += pfac * (_nbytes(w.shape, w.dtype) + _nbytes(b.shape, b.dtype))
        need += pfac * _nbytes(w_out.shape, w_out.dtype)
        need += 2 * _nbytes((tm, out_size), x.dtype)
        need += 4 * tm * widest * 4  # activation / accumulator slack
        cap = max(16 * 1024 * 1024,
                  min(int(0.85 * vmem_cap), vmem_cap - 8 * 1024 * 1024))
        vmem_limit = int(min(cap, max(16 * 1024 * 1024, 2 * need)))

        return pl.pallas_call(
            _make_mlp_kernel(num_hidden, compute_dtype),
            out_shape=jax.ShapeDtypeStruct((m_pad, out_size), x.dtype),
            grid_spec=pltpu.PrefetchScalarGridSpec(
                num_scalar_prefetch=0,
                grid=(grid_m,),
                in_specs=in_specs,
                out_specs=pl.BlockSpec((tm, out_size), lambda i: (i, 0)),
            ),
            compiler_params=pltpu.CompilerParams(
                dimension_semantics=("parallel",),
                vmem_limit_bytes=vmem_limit,
            ),
        )

    try:
        out2 = _build_call(True)(*flat_args)
    except Exception:
        # pipeline_mode / pl.Buffered(1) not supported on this jax version:
        # fall back to default double-buffered parameter blocks.
        out2 = _build_call(False)(*flat_args)

    return out2[:m].reshape(*lead, out_size)


def init_fcnn_policy_params(key, input_size, hidden_sizes, out_size):
    """Init mimicking the module's kaiming_uniform_ / uniform_(-0.01, 0.01)."""
    params = {"hidden": [], "out": None}
    fan_in = input_size
    for h in hidden_sizes:
        key, kw, kb = jax.random.split(key, 3)
        bound = jnp.sqrt(6.0 / fan_in)  # kaiming_uniform_ (gain=sqrt(2), a=0)
        w = jax.random.uniform(kw, (fan_in, h), jnp.float32, minval=-bound, maxval=bound)
        b = jax.random.uniform(kb, (1, h), jnp.float32, minval=-0.01, maxval=0.01)
        params["hidden"].append((w, b))
        fan_in = h
    key, kw = jax.random.split(key)
    bound = jnp.sqrt(6.0 / fan_in)
    params["out"] = jax.random.uniform(
        kw, (fan_in, out_size), jnp.float32, minval=-bound, maxval=bound
    )
    return params


def _reference_forward(x, params, compute_dtype=jnp.bfloat16):
    """Pure-JAX reference matching the kernel's numerics (dropout_rate=0.0)."""
    h = x.astype(compute_dtype)
    for (w, b) in params["hidden"]:
        a = jnp.dot(h, w.astype(compute_dtype),
                    preferred_element_type=jnp.float32) + b[0]
        a = jnp.where(a > 0, a, NEG_SLOPE * a)
        h = a.astype(compute_dtype)
    return jnp.dot(
        h, params["out"].astype(compute_dtype), preferred_element_type=jnp.float32
    ).astype(x.dtype)


if __name__ == "__main__":
    # Small shapes consistent with the module's forward: x is (b, t, q).
    input_q = 16          # q = 2 ** num_qubits
    hidden_sizes = [32, 32]
    out_size = 8
    batch, t = 2, 8

    key = jax.random.PRNGKey(0)
    key, kx = jax.random.split(key)
    x = jax.random.normal(kx, (batch, t, input_q), jnp.float32)

    raw_params = init_fcnn_policy_params(key, input_q, hidden_sizes, out_size)
    # One-time parameter prep (casts + lane padding) outside the hot path.
    prepped = prepare_params(raw_params)

    out = jax.block_until_ready(fcnn_policy_forward(x, prepped))
    ref = _reference_forward(x, raw_params)
    assert out.shape == (batch, t, out_size)
    assert jnp.allclose(out, ref, atol=1e-2, rtol=1e-2)

    # Ragged-M case (batch*time not a multiple of the sublane/tile size).
    key, kx2 = jax.random.split(key)
    x2 = jax.random.normal(kx2, (5, 7, input_q), jnp.float32)
    out2 = jax.block_until_ready(fcnn_policy_forward(x2, prepped))
    ref2 = _reference_forward(x2, raw_params)
    assert out2.shape == (5, 7, out_size)
    assert jnp.allclose(out2, ref2, atol=1e-2, rtol=1e-2)

    print("KERNEL_OK")
</pallas_src>

<mosaic_0001>
module attributes {stable_mosaic.version = 11 : i64} {
  func.func @kernel(%arg0: i32, %arg1: memref<16x16xf32, #tpu.memory_space<vmem>>, %arg2: memref<16x128xbf16, #tpu.memory_space<vmem>>, %arg3: memref<1x128xf32, #tpu.memory_space<vmem>>, %arg4: memref<128x128xbf16, #tpu.memory_space<vmem>>, %arg5: memref<1x128xf32, #tpu.memory_space<vmem>>, %arg6: memref<128x8xbf16, #tpu.memory_space<vmem>>, %arg7: memref<16x8xf32, #tpu.memory_space<vmem>>) attributes {dimension_semantics = [#tpu.dimension_semantics<parallel>], iteration_bounds = array<i64: 1>, scalar_prefetch = 0 : i64, scratch_operands = 0 : i64, tpu.core_type = #tpu.core_type<tc>, window_params = [{transform_indices = @transform_0, window_bounds = array<i64: 16, 16>}, {pipeline_mode = #tpu.pipeline_mode<synchronous>, transform_indices = @transform_1, window_bounds = array<i64: 16, 128>}, {pipeline_mode = #tpu.pipeline_mode<synchronous>, transform_indices = @transform_2, window_bounds = array<i64: 1, 128>}, {pipeline_mode = #tpu.pipeline_mode<synchronous>, transform_indices = @transform_3, window_bounds = array<i64: 128, 128>}, {pipeline_mode = #tpu.pipeline_mode<synchronous>, transform_indices = @transform_4, window_bounds = array<i64: 1, 128>}, {pipeline_mode = #tpu.pipeline_mode<synchronous>, transform_indices = @transform_5, window_bounds = array<i64: 128, 8>}, {transform_indices = @transform_6, window_bounds = array<i64: 16, 8>}]} {
    %c0 = arith.constant 0 : index
    %c0_0 = arith.constant 0 : index
    %0 = vector.load %arg1[%c0, %c0_0] : memref<16x16xf32, #tpu.memory_space<vmem>>, vector<16x16xf32>
    %1 = arith.truncf %0 : vector<16x16xf32> to vector<16x16xbf16>
    %c0_1 = arith.constant 0 : index
    %c0_2 = arith.constant 0 : index
    %2 = vector.load %arg2[%c0_1, %c0_2] : memref<16x128xbf16, #tpu.memory_space<vmem>>, vector<16x128xbf16>
    %c0_3 = arith.constant 0 : index
    %c0_4 = arith.constant 0 : index
    %3 = vector.load %arg3[%c0_3, %c0_4] : memref<1x128xf32, #tpu.memory_space<vmem>>, vector<1x128xf32>
    %cst = arith.constant dense<0.000000e+00> : vector<16x128xf32>
    %4 = tpu.matmul %1, %2, %cst {dimension_numbers = #tpu.dot_dimension_numbers<[1], [0], [0], [1], [0, 0, 1, 1], [], []>} : vector<16x16xbf16>, vector<16x128xbf16>, vector<16x128xf32> -> vector<16x128xf32>
    %5 = vector.broadcast %3 : vector<1x128xf32> to vector<16x128xf32>
    %6 = arith.addf %4, %5 : vector<16x128xf32>
    %cst_5 = arith.constant 0.000000e+00 : f32
    %7 = vector.broadcast %cst_5 : f32 to vector<16x128xf32>
    %8 = arith.cmpf ogt, %6, %7 : vector<16x128xf32>
    %cst_6 = arith.constant 0.00999999977 : f32
    %9 = vector.broadcast %cst_6 : f32 to vector<16x128xf32>
    %10 = arith.mulf %9, %6 : vector<16x128xf32>
    %11 = arith.select %8, %6, %10 : vector<16x128xi1>, vector<16x128xf32>
    %12 = arith.truncf %11 : vector<16x128xf32> to vector<16x128xbf16>
    %c0_7 = arith.constant 0 : index
    %c0_8 = arith.constant 0 : index
    %13 = vector.load %arg4[%c0_7, %c0_8] : memref<128x128xbf16, #tpu.memory_space<vmem>>, vector<128x128xbf16>
    %c0_9 = arith.constant 0 : index
    %c0_10 = arith.constant 0 : index
    %14 = vector.load %arg5[%c0_9, %c0_10] : memref<1x128xf32, #tpu.memory_space<vmem>>, vector<1x128xf32>
    %cst_11 = arith.constant dense<0.000000e+00> : vector<16x128xf32>
    %15 = tpu.matmul %12, %13, %cst_11 {dimension_numbers = #tpu.dot_dimension_numbers<[1], [0], [0], [1], [0, 0, 1, 1], [], []>} : vector<16x128xbf16>, vector<128x128xbf16>, vector<16x128xf32> -> vector<16x128xf32>
    %16 = vector.broadcast %14 : vector<1x128xf32> to vector<16x128xf32>
    %17 = arith.addf %15, %16 : vector<16x128xf32>
    %cst_12 = arith.constant 0.000000e+00 : f32
    %18 = vector.broadcast %cst_12 : f32 to vector<16x128xf32>
    %19 = arith.cmpf ogt, %17, %18 : vector<16x128xf32>
    %cst_13 = arith.constant 0.00999999977 : f32
    %20 = vector.broadcast %cst_13 : f32 to vector<16x128xf32>
    %21 = arith.mulf %20, %17 : vector<16x128xf32>
    %22 = arith.select %19, %17, %21 : vector<16x128xi1>, vector<16x128xf32>
    %23 = arith.truncf %22 : vector<16x128xf32> to vector<16x128xbf16>
    %c0_14 = arith.constant 0 : index
    %c0_15 = arith.constant 0 : index
    %24 = vector.load %arg6[%c0_14, %c0_15] : memref<128x8xbf16, #tpu.memory_space<vmem>>, vector<128x8xbf16>
    %cst_16 = arith.constant dense<0.000000e+00> : vector<16x8xf32>
    %25 = tpu.matmul %23, %24, %cst_16 {dimension_numbers = #tpu.dot_dimension_numbers<[1], [0], [0], [1], [0, 0, 1, 1], [], []>} : vector<16x128xbf16>, vector<128x8xbf16>, vector<16x8xf32> -> vector<16x8xf32>
    %c0_17 = arith.constant 0 : index
    %c0_18 = arith.constant 0 : index
    %26 = vector.load %arg7[%c0_17, %c0_18] : memref<16x8xf32, #tpu.memory_space<vmem>>, vector<16x8xf32>
    tpu.vector_store %arg7[%c0_17, %c0_18], %25 {strides = array<i32>} : memref<16x8xf32, #tpu.memory_space<vmem>>, vector<16x8xf32>,
    return
  }
  func.func @transform_0(%arg0: i32) -> (i32, i32) {
    %c0_i32 = arith.constant 0 : i32
    %c0_i32_0 = arith.constant 0 : i32
    return %arg0, %c0_i32 : i32, i32
  }
  func.func @transform_1(%arg0: i32) -> (i32, i32) {
    %c0_i32 = arith.constant 0 : i32
    %c0_i32_0 = arith.constant 0 : i32
    %c0_i32_1 = arith.constant 0 : i32
    return %c0_i32, %c0_i32_0 : i32, i32
  }
  func.func @transform_2(%arg0: i32) -> (i32, i32) {
    %c0_i32 = arith.constant 0 : i32
    %c0_i32_0 = arith.constant 0 : i32
    %c0_i32_1 = arith.constant 0 : i32
    return %c0_i32, %c0_i32_0 : i32, i32
  }
  func.func @transform_3(%arg0: i32) -> (i32, i32) {
    %c0_i32 = arith.constant 0 : i32
    %c0_i32_0 = arith.constant 0 : i32
    %c0_i32_1 = arith.constant 0 : i32
    return %c0_i32, %c0_i32_0 : i32, i32
  }
  func.func @transform_4(%arg0: i32) -> (i32, i32) {
    %c0_i32 = arith.constant 0 : i32
    %c0_i32_0 = arith.constant 0 : i32
    %c0_i32_1 = arith.constant 0 : i32
    return %c0_i32, %c0_i32_0 : i32, i32
  }
  func.func @transform_5(%arg0: i32) -> (i32, i32) {
    %c0_i32 = arith.constant 0 : i32
    %c0_i32_0 = arith.constant 0 : i32
    %c0_i32_1 = arith.constant 0 : i32
    return %c0_i32, %c0_i32_0 : i32, i32
  }
  func.func @transform_6(%arg0: i32) -> (i32, i32) {
    %c0_i32 = arith.constant 0 : i32
    %c0_i32_0 = arith.constant 0 : i32
    return %arg0, %c0_i32 : i32, i32
  }
}

module attributes {stable_mosaic.version = 11 : i64} {
  func.func @kernel(%arg0: i32, %arg1: memref<16x16xf32, #tpu.memory_space<vmem>>, %arg2: memref<16x128xbf16, #tpu.memory_space<vmem>>, %arg3: memref<1x128xf32, #tpu.memory_space<vmem>>, %arg4: memref<128x128xbf16, #tpu.memory_space<vmem>>, %arg5: memref<1x128xf32, #tpu.memory_space<vmem>>, %arg6: memref<128x8xbf16, #tpu.memory_space<vmem>>, %arg7: memref<16x8xf32, #tpu.memory_space<vmem>>) attributes {dimension_semantics = [#tpu.dimension_semantics<parallel>], iteration_bounds = array<i64: 1>, scalar_prefetch = 0 : i64, scratch_operands = 0 : i64, tpu.core_type = #tpu.core_type<tc>, window_params = [{transform_indices = @transform_0, window_bounds = array<i64: 16, 16>}, {pipeline_mode = #tpu.pipeline_mode<synchronous>, transform_indices = @transform_1, window_bounds = array<i64: 16, 128>}, {pipeline_mode = #tpu.pipeline_mode<synchronous>, transform_indices = @transform_2, window_bounds = array<i64: 1, 128>}, {pipeline_mode = #tpu.pipeline_mode<synchronous>, transform_indices = @transform_3, window_bounds = array<i64: 128, 128>}, {pipeline_mode = #tpu.pipeline_mode<synchronous>, transform_indices = @transform_4, window_bounds = array<i64: 1, 128>}, {pipeline_mode = #tpu.pipeline_mode<synchronous>, transform_indices = @transform_5, window_bounds = array<i64: 128, 8>}, {transform_indices = @transform_6, window_bounds = array<i64: 16, 8>}]} {
    %c0 = arith.constant 0 : index
    %c0_0 = arith.constant 0 : index
    %0 = vector.load %arg1[%c0, %c0_0] : memref<16x16xf32, #tpu.memory_space<vmem>>, vector<16x16xf32>
    %1 = arith.truncf %0 : vector<16x16xf32> to vector<16x16xbf16>
    %c0_1 = arith.constant 0 : index
    %c0_2 = arith.constant 0 : index
    %2 = vector.load %arg2[%c0_1, %c0_2] : memref<16x128xbf16, #tpu.memory_space<vmem>>, vector<16x128xbf16>
    %c0_3 = arith.constant 0 : index
    %c0_4 = arith.constant 0 : index
    %3 = vector.load %arg3[%c0_3, %c0_4] : memref<1x128xf32, #tpu.memory_space<vmem>>, vector<1x128xf32>
    %cst = arith.constant dense<0.000000e+00> : vector<16x128xf32>
    %4 = tpu.matmul %1, %2, %cst {dimension_numbers = #tpu.dot_dimension_numbers<[1], [0], [0], [1], [0, 0, 1, 1], [], []>} : vector<16x16xbf16>, vector<16x128xbf16>, vector<16x128xf32> -> vector<16x128xf32>
    %5 = vector.broadcast %3 : vector<1x128xf32> to vector<16x128xf32>
    %6 = arith.addf %4, %5 : vector<16x128xf32>
    %cst_5 = arith.constant 0.000000e+00 : f32
    %7 = vector.broadcast %cst_5 : f32 to vector<16x128xf32>
    %8 = arith.cmpf ogt, %6, %7 : vector<16x128xf32>
    %cst_6 = arith.constant 0.00999999977 : f32
    %9 = vector.broadcast %cst_6 : f32 to vector<16x128xf32>
    %10 = arith.mulf %9, %6 : vector<16x128xf32>
    %11 = arith.select %8, %6, %10 : vector<16x128xi1>, vector<16x128xf32>
    %12 = arith.truncf %11 : vector<16x128xf32> to vector<16x128xbf16>
    %c0_7 = arith.constant 0 : index
    %c0_8 = arith.constant 0 : index
    %13 = vector.load %arg4[%c0_7, %c0_8] : memref<128x128xbf16, #tpu.memory_space<vmem>>, vector<128x128xbf16>
    %c0_9 = arith.constant 0 : index
    %c0_10 = arith.constant 0 : index
    %14 = vector.load %arg5[%c0_9, %c0_10] : memref<1x128xf32, #tpu.memory_space<vmem>>, vector<1x128xf32>
    %cst_11 = arith.constant dense<0.000000e+00> : vector<16x128xf32>
    %15 = tpu.matmul %12, %13, %cst_11 {dimension_numbers = #tpu.dot_dimension_numbers<[1], [0], [0], [1], [0, 0, 1, 1], [], []>} : vector<16x128xbf16>, vector<128x128xbf16>, vector<16x128xf32> -> vector<16x128xf32>
    %16 = vector.broadcast %14 : vector<1x128xf32> to vector<16x128xf32>
    %17 = arith.addf %15, %16 : vector<16x128xf32>
    %cst_12 = arith.constant 0.000000e+00 : f32
    %18 = vector.broadcast %cst_12 : f32 to vector<16x128xf32>
    %19 = arith.cmpf ogt, %17, %18 : vector<16x128xf32>
    %cst_13 = arith.constant 0.00999999977 : f32
    %20 = vector.broadcast %cst_13 : f32 to vector<16x128xf32>
    %21 = arith.mulf %20, %17 : vector<16x128xf32>
    %22 = arith.select %19, %17, %21 : vector<16x128xi1>, vector<16x128xf32>
    %23 = arith.truncf %22 : vector<16x128xf32> to vector<16x128xbf16>
    %c0_14 = arith.constant 0 : index
    %c0_15 = arith.constant 0 : index
    %24 = vector.load %arg6[%c0_14, %c0_15] : memref<128x8xbf16, #tpu.memory_space<vmem>>, vector<128x8xbf16>
    %cst_16 = arith.constant dense<0.000000e+00> : vector<16x8xf32>
    %25 = tpu.matmul %23, %24, %cst_16 {dimension_numbers = #tpu.dot_dimension_numbers<[1], [0], [0], [1], [0, 0, 1, 1], [], []>} : vector<16x128xbf16>, vector<128x8xbf16>, vector<16x8xf32> -> vector<16x8xf32>
    %c0_17 = arith.constant 0 : index
    %c0_18 = arith.constant 0 : index
    %26 = vector.load %arg7[%c0_17, %c0_18] : memref<16x8xf32, #tpu.memory_space<vmem>>, vector<16x8xf32>
    tpu.vector_store %arg7[%c0_17, %c0_18], %25 {strides = array<i32>} : memref<16x8xf32, #tpu.memory_space<vmem>>, vector<16x8xf32>,
    return
  }
  func.func @transform_0(%arg0: i32) -> (i32, i32) {
    %c0_i32 = arith.constant 0 : i32
    %c0_i32_0 = arith.constant 0 : i32
    return %arg0, %c0_i32 : i32, i32
  }
  func.func @transform_1(%arg0: i32) -> (i32, i32) {
    %c0_i32 = arith.constant 0 : i32
    %c0_i32_0 = arith.constant 0 : i32
    %c0_i32_1 = arith.constant 0 : i32
    return %c0_i32, %c0_i32_0 : i32, i32
  }
  func.func @transform_2(%arg0: i32) -> (i32, i32) {
    %c0_i32 = arith.constant 0 : i32
    %c0_i32_0 = arith.constant 0 : i32
    %c0_i32_1 = arith.constant 0 : i32
    return %c0_i32, %c0_i32_0 : i32, i32
  }
  func.func @transform_3(%arg0: i32) -> (i32, i32) {
    %c0_i32 = arith.constant 0 : i32
    %c0_i32_0 = arith.constant 0 : i32
    %c0_i32_1 = arith.constant 0 : i32
    return %c0_i32, %c0_i32_0 : i32, i32
  }
  func.func @transform_4(%arg0: i32) -> (i32, i32) {
    %c0_i32 = arith.constant 0 : i32
    %c0_i32_0 = arith.constant 0 : i32
    %c0_i32_1 = arith.constant 0 : i32
    return %c0_i32, %c0_i32_0 : i32, i32
  }
  func.func @transform_5(%arg0: i32) -> (i32, i32) {
    %c0_i32 = arith.constant 0 : i32
    %c0_i32_0 = arith.constant 0 : i32
    %c0_i32_1 = arith.constant 0 : i32
    return %c0_i32, %c0_i32_0 : i32, i32
  }
  func.func @transform_6(%arg0: i32) -> (i32, i32) {
    %c0_i32 = arith.constant 0 : i32
    %c0_i32_0 = arith.constant 0 : i32
    return %arg0, %c0_i32 : i32, i32
  }
}

</mosaic_0001>

<llo_original>
// kernel: tpu_custom_call.1
$region0: #{tpu_custom_call.1}
  #allocation0 [shape = 'u32[]', space=smem, size = 0x4, offset = 0x4, fixed_abs, tag = 'smem constant byte address 0x4 - core index']
  #allocation1 [shape = 'u32[144,128]{1,0:T(1,128)}', space=vmem, size = 0x12000, scoped, tag = 'internal scratch']
  %s0 = inlined_call_operand.hbm [shape: f32[16,16], index: 0, kind: input, shape index: {}]
  %s1 = inlined_call_operand.vmem [shape: bf16[16,128], index: 1, kind: input, shape index: {}]
  %s2 = inlined_call_operand.vmem [shape: f32[1,128], index: 2, kind: input, shape index: {}]
  %s3 = inlined_call_operand.vmem [shape: bf16[128,128], index: 3, kind: input, shape index: {}]
  %s4 = inlined_call_operand.hbm [shape: f32[1,128], index: 4, kind: input, shape index: {}]
  %s5 = inlined_call_operand.vmem [shape: bf16[128,8], index: 5, kind: input, shape index: {}]
  %s6 = inlined_call_operand.vmem [shape: f32[16,8], index: 6, kind: output, shape index: {}]
  %s7 = sld [smem:[#allocation0]]
  $region42: #{tpu_custom_call.1} parent=0
    _
  %s9 = ssub.s32 1, %s7
  %s10 = scalar_select 0, %s9, %s7
  $region1: #{tpu_custom_call.1} parent=0
    #allocation2 [shape = 'u8[8192]{0}', space=vmem, size = 0x2000, scoped, tag = 'input window, operand 0, single buffered']
    #allocation3 [shape = 's32[1]{0}', space=sflag, size = 0x4, scoped, tag = 'scoped memory for tpu_custom_call.1']
    #allocation4 [shape = 'u8[512]{0}', space=vmem, size = 0x400, scoped, tag = 'input window, operand 4, single buffered']
    #allocation5 [shape = 's32[1]{0}', space=sflag, size = 0x4, scoped, tag = 'scoped memory for tpu_custom_call.1']
    %11 = vsyncpa [#allocation3], 0
    %12 = vsyncpa [#allocation5], 0
    // Predicated region
    $region2: #{tpu_custom_call.1} parent=1 // pred_check
      _
    $region3: #{tpu_custom_call.1} parent=1 // pred_check_branch
      %14 = sbr.rel (0) target = $region5
    $region4: #{tpu_custom_call.1} parent=1 // pred_region
      %s16 = ssub.s32 256, 256
      %17 = vsyncadd [#allocation3], %s16
      %s18 = sshll.u32 [#allocation2], 4
      %s19 = int_to_ptr.vmem [resolvable:$true] %s18
      %24 = dma.hbm_to_vmem [thread:$0]  %s0, 256, %s19, [#allocation3], 128, 128, 8
    $region5: #{tpu_custom_call.1} parent=1 // pred_fallthru
      _
    // Predicated region
    $region6: #{tpu_custom_call.1} parent=1 // pred_check
      _
    $region7: #{tpu_custom_call.1} parent=1 // pred_check_branch
      %26 = sbr.rel (0) target = $region9
    $region8: #{tpu_custom_call.1} parent=1 // pred_region
      _
    $region9: #{tpu_custom_call.1} parent=1 // pred_fallthru
      _
    // Predicated region
    $region10: #{tpu_custom_call.1} parent=1 // pred_check
      _
    $region11: #{tpu_custom_call.1} parent=1 // pred_check_branch
      %28 = sbr.rel (0) target = $region13
    $region12: #{tpu_custom_call.1} parent=1 // pred_region
      _
    $region13: #{tpu_custom_call.1} parent=1 // pred_fallthru
      _
    // Predicated region
    $region14: #{tpu_custom_call.1} parent=1 // pred_check
      _
    $region15: #{tpu_custom_call.1} parent=1 // pred_check_branch
      %30 = sbr.rel (0) target = $region17
    $region16: #{tpu_custom_call.1} parent=1 // pred_region
      _
    $region17: #{tpu_custom_call.1} parent=1 // pred_fallthru
      _
    // Predicated region
    $region18: #{tpu_custom_call.1} parent=1 // pred_check
      _
    $region19: #{tpu_custom_call.1} parent=1 // pred_check_branch
      %32 = sbr.rel (0) target = $region21
    $region20: #{tpu_custom_call.1} parent=1 // pred_region
      %s34 = ssub.s32 16, 16
      %35 = vsyncadd [#allocation5], %s34
      %s37 = sshll.u32 [#allocation4], 4
      %s38 = int_to_ptr.vmem [resolvable:$true] %s37
      %40 = dma.hbm_to_vmem [thread:$0]  %s4, 16, %s38, [#allocation5]
    $region21: #{tpu_custom_call.1} parent=1 // pred_fallthru
      _
    // Predicated region
    $region22: #{tpu_custom_call.1} parent=1 // pred_check
      _
    $region23: #{tpu_custom_call.1} parent=1 // pred_check_branch
      %42 = sbr.rel (0) target = $region25
    $region24: #{tpu_custom_call.1} parent=1 // pred_region
      _
    $region25: #{tpu_custom_call.1} parent=1 // pred_fallthru
      _
    // Predicated region
    $region26: #{tpu_custom_call.1} parent=1 // pred_check
      _
    $region27: #{tpu_custom_call.1} parent=1 // pred_check_branch
      %44 = sbr.rel (0) target = $region29
    $region28: #{tpu_custom_call.1} parent=1 // pred_region
      %45 = dma.done [#allocation3], 256
    $region29: #{tpu_custom_call.1} parent=1 // pred_fallthru
      _
    // Predicated region
    $region30: #{tpu_custom_call.1} parent=1 // pred_check
      _
    $region31: #{tpu_custom_call.1} parent=1 // pred_check_branch
      %47 = sbr.rel (0) target = $region33
    $region32: #{tpu_custom_call.1} parent=1 // pred_region
      %48 = dma.done [#allocation5], 16
    $region33: #{tpu_custom_call.1} parent=1 // pred_fallthru
      _
    %v50 = vld [vmem:[#allocation2] sm:$0xff]
    %v51 = vld [vmem:[#allocation2 + $0x8] sm:$0xff]
    %v52 = vpack.c.bf16 %v51, %v50
    %v53 = vld [vmem:[%s1] sm:$0xf]
    %v54 = vld [vmem:[%s1 + $0x4] sm:$0xf]
    %v55 = vld [vmem:[%s2] sm:$0x1]
    %v57 = vlaneseq
    %v58 = vshrl.u32 %v57, 7
    %v59 = vsub.s32 0, %v58
    %v60 = vrot.slane %v55, %v59
    %v64 = vunpack.c.l.b16 %v53
    %v65 = vunpack.c.l.b16 %v54
    %v66 = vpack.c.b16 %v65, %v64
    %vm68 = vcmask 130048
    %v70 = vsel %vm68, %v52, 0
    %72 = vmatprep.subr.bf16.mxu0 0
    %73 = vmatpush1.bf16.msra.mxu0 0
    %74 = vmatprep.subr.bf16.mxu0 0
    %75 = vmatpush1.bf16.msra.mxu0 0
    %76 = vmatprep.subr.bf16.mxu0 0
    %77 = vmatpush1.bf16.msra.mxu0 0
    %78 = vmatprep.subr.bf16.mxu0 0
    %79 = vmatpush1.bf16.msra.mxu0 0
    %80 = vmatprep.subr.bf16.mxu0 0
    %81 = vmatpush1.bf16.msra.mxu0 0
    %82 = vmatprep.subr.bf16.mxu0 0
    %83 = vmatpush1.bf16.msra.mxu0 0
    %84 = vmatprep.subr.bf16.mxu0 0
    %85 = vmatpush1.bf16.msra.mxu0 0
    %86 = vmatprep.subr.bf16.mxu0 0
    %87 = vmatpush1.bf16.msra.mxu0 %v66
    %88 = vmatprep.subr.bf16.mxu0 0
    %89 = vmatpush2.bf16.msra.mxu0 0
    %90 = vmatprep.subr.bf16.mxu0 0
    %91 = vmatpush2.bf16.msra.mxu0 0
    %92 = vmatprep.subr.bf16.mxu0 0
    %93 = vmatpush2.bf16.msra.mxu0 0
    %94 = vmatprep.subr.bf16.mxu0 0
    %95 = vmatpush2.bf16.msra.mxu0 0
    %96 = vmatprep.subr.bf16.mxu0 0
    %97 = vmatpush2.bf16.msra.mxu0 0
    %98 = vmatprep.subr.bf16.mxu0 0
    %99 = vmatpush2.bf16.msra.mxu0 0
    %100 = vmatprep.subr.bf16.mxu0 0
    %101 = vmatpush2.bf16.msra.mxu0 0
    %102 = vmatprep.subr.bf16.mxu0 0
    %103 = vmatpush2.bf16.msra.mxu0 0
    %104 = vmatprep.mubr.bf16.mxu0 0
    %105 = vmatmul.mubr.bf16.gmra.mxu0 %v70
    %v106 = vpop.f32.mrf.mxu0
    %v107 = vadd.f32 %v60, %v106
    %v108 = vpop.f32.mrf.mxu0
    %v109 = vpop.f32.mrf.mxu0
    %v110 = vadd.f32 %v60, %v109
    %v111 = vpop.f32.mrf.mxu0
    %112 = vdwg.mxu0
    %vm113 = vcmp.gt.f32.partialorder %v107, 0.0
    %vm114 = vcmp.gt.f32.partialorder %v110, 0.0
    %v115 = vmul.f32 %v107, 0.01
    %v116 = vmul.f32 %v110, 0.01
    %v117 = vsel %vm113, %v107, %v115
    %v118 = vsel %vm114, %v110, %v116
    %v119 = vpack.c.bf16 %v118, %v117
    %v120 = vld [vmem:[%s3] sm:$0xf]
    %v121 = vld [vmem:[%s3 + $0x4] sm:$0xf]
    %v122 = vld [vmem:[%s3 + $0x8] sm:$0xf]
    %v123 = vld [vmem:[%s3 + $0xc] sm:$0xf]
    %v124 = vld [vmem:[%s3 + $0x10] sm:$0xf]
    %v125 = vld [vmem:[%s3 + $0x14] sm:$0xf]
    %v126 = vld [vmem:[%s3 + $0x18] sm:$0xf]
    %v127 = vld [vmem:[%s3 + $0x1c] sm:$0xf]
    %v128 = vld [vmem:[%s3 + $0x20] sm:$0xf]
    %v129 = vld [vmem:[%s3 + $0x24] sm:$0xf]
    %v130 = vld [vmem:[%s3 + $0x28] sm:$0xf]
    %v131 = vld [vmem:[%s3 + $0x2c] sm:$0xf]
    %v132 = vld [vmem:[%s3 + $0x30] sm:$0xf]
    %v133 = vld [vmem:[%s3 + $0x34] sm:$0xf]
    %v134 = vld [vmem:[%s3 + $0x38] sm:$0xf]
    %v135 = vld [vmem:[%s3 + $0x3c] sm:$0xf]
    %v136 = vld [vmem:[#allocation4] sm:$0x1]
    %v138 = vlaneseq
    %v139 = vshrl.u32 %v138, 7
    %v140 = vsub.s32 0, %v139
    %v141 = vrot.slane %v136, %v140
    %v159 = vunpack.c.l.b16 %v120
    %v160 = vunpack.c.l.b16 %v121
    %v161 = vunpack.c.l.b16 %v122
    %v162 = vunpack.c.l.b16 %v123
    %v163 = vunpack.c.l.b16 %v124
    %v164 = vunpack.c.l.b16 %v125
    %v165 = vunpack.c.l.b16 %v126
    %v166 = vunpack.c.l.b16 %v127
    %v167 = vunpack.c.l.b16 %v128
    %v168 = vunpack.c.l.b16 %v129
    %v169 = vunpack.c.l.b16 %v130
    %v170 = vunpack.c.l.b16 %v131
    %v171 = vunpack.c.l.b16 %v132
    %v172 = vunpack.c.l.b16 %v133
    %v173 = vunpack.c.l.b16 %v134
    %v174 = vunpack.c.l.b16 %v135
    %v175 = vpack.c.b16 %v160, %v159
    %v176 = vpack.c.b16 %v162, %v161
    %v177 = vpack.c.b16 %v164, %v163
    %v178 = vpack.c.b16 %v166, %v165
    %v179 = vpack.c.b16 %v168, %v167
    %v180 = vpack.c.b16 %v170, %v169
    %v181 = vpack.c.b16 %v172, %v171
    %v182 = vpack.c.b16 %v174, %v173
    %191 = vmatprep.subr.bf16.mxu0 0
    %192 = vmatpush1.bf16.msra.mxu0 %v182
    %193 = vmatprep.subr.bf16.mxu0 0
    %194 = vmatpush1.bf16.msra.mxu0 %v181
    %195 = vmatprep.subr.bf16.mxu0 0
    %196 = vmatpush1.bf16.msra.mxu0 %v180
    %197 = vmatprep.subr.bf16.mxu0 0
    %198 = vmatpush1.bf16.msra.mxu0 %v179
    %199 = vmatprep.subr.bf16.mxu0 0
    %200 = vmatpush1.bf16.msra.mxu0 %v178
    %201 = vmatprep.subr.bf16.mxu0 0
    %202 = vmatpush1.bf16.msra.mxu0 %v177
    %203 = vmatprep.subr.bf16.mxu0 0
    %204 = vmatpush1.bf16.msra.mxu0 %v176
    %205 = vmatprep.subr.bf16.mxu0 0
    %206 = vmatpush1.bf16.msra.mxu0 %v175
    %207 = vmatprep.subr.bf16.mxu0 0
    %208 = vmatpush2.bf16.msra.mxu0 0
    %209 = vmatprep.subr.bf16.mxu0 0
    %210 = vmatpush2.bf16.msra.mxu0 0
    %211 = vmatprep.subr.bf16.mxu0 0
    %212 = vmatpush2.bf16.msra.mxu0 0
    %213 = vmatprep.subr.bf16.mxu0 0
    %214 = vmatpush2.bf16.msra.mxu0 0
    %215 = vmatprep.subr.bf16.mxu0 0
    %216 = vmatpush2.bf16.msra.mxu0 0
    %217 = vmatprep.subr.bf16.mxu0 0
    %218 = vmatpush2.bf16.msra.mxu0 0
    %219 = vmatprep.subr.bf16.mxu0 0
    %220 = vmatpush2.bf16.msra.mxu0 0
    %221 = vmatprep.subr.bf16.mxu0 0
    %222 = vmatpush2.bf16.msra.mxu0 0
    %223 = vmatprep.mubr.bf16.mxu0 0
    %224 = vmatmul.mubr.bf16.gmra.mxu0 %v119
    %v225 = vpop.f32.mrf.mxu0
    %v226 = vadd.f32 %v141, %v225
    %v227 = vpop.f32.mrf.mxu0
    %v228 = vpop.f32.mrf.mxu0
    %v229 = vadd.f32 %v141, %v228
    %v230 = vpop.f32.mrf.mxu0
    %231 = vdwg.mxu0
    %vm232 = vcmp.gt.f32.partialorder %v226, 0.0
    %vm233 = vcmp.gt.f32.partialorder %v229, 0.0
    %v234 = vmul.f32 %v226, 0.01
    %v235 = vmul.f32 %v229, 0.01
    %v236 = vsel %vm232, %v226, %v234
    %v237 = vsel %vm233, %v229, %v235
    %v238 = vpack.c.bf16 %v237, %v236
    %v239 = vld [vmem:[%s5] sm:$0xf]
    %v240 = vld [vmem:[%s5 + $0x4] sm:$0xf]
    %v241 = vld [vmem:[%s5 + $0x8] sm:$0xf]
    %v242 = vld [vmem:[%s5 + $0xc] sm:$0xf]
    %v243 = vld [vmem:[%s5 + $0x10] sm:$0xf]
    %v244 = vld [vmem:[%s5 + $0x14] sm:$0xf]
    %v245 = vld [vmem:[%s5 + $0x18] sm:$0xf]
    %v246 = vld [vmem:[%s5 + $0x1c] sm:$0xf]
    %v247 = vld [vmem:[%s5 + $0x20] sm:$0xf]
    %v248 = vld [vmem:[%s5 + $0x24] sm:$0xf]
    %v249 = vld [vmem:[%s5 + $0x28] sm:$0xf]
    %v250 = vld [vmem:[%s5 + $0x2c] sm:$0xf]
    %v251 = vld [vmem:[%s5 + $0x30] sm:$0xf]
    %v252 = vld [vmem:[%s5 + $0x34] sm:$0xf]
    %v253 = vld [vmem:[%s5 + $0x38] sm:$0xf]
    %v254 = vld [vmem:[%s5 + $0x3c] sm:$0xf]
    %v271 = vunpack.c.l.b16 %v239
    %v272 = vunpack.c.l.b16 %v240
    %v273 = vunpack.c.l.b16 %v241
    %v274 = vunpack.c.l.b16 %v242
    %v275 = vunpack.c.l.b16 %v243
    %v276 = vunpack.c.l.b16 %v244
    %v277 = vunpack.c.l.b16 %v245
    %v278 = vunpack.c.l.b16 %v246
    %v279 = vunpack.c.l.b16 %v247
    %v280 = vunpack.c.l.b16 %v248
    %v281 = vunpack.c.l.b16 %v249
    %v282 = vunpack.c.l.b16 %v250
    %v283 = vunpack.c.l.b16 %v251
    %v284 = vunpack.c.l.b16 %v252
    %v285 = vunpack.c.l.b16 %v253
    %v286 = vunpack.c.l.b16 %v254
    %v287 = vpack.c.b16 %v272, %v271
    %v288 = vpack.c.b16 %v274, %v273
    %v289 = vpack.c.b16 %v276, %v275
    %v290 = vpack.c.b16 %v278, %v277
    %v291 = vpack.c.b16 %v280, %v279
    %v292 = vpack.c.b16 %v282, %v281
    %v293 = vpack.c.b16 %v284, %v283
    %v294 = vpack.c.b16 %v286, %v285
    %303 = vmatprep.subr.bf16.mxu0 0
    %304 = vmatpush1.bf16.msra.mxu0 %v294
    %305 = vmatprep.subr.bf16.mxu0 0
    %306 = vmatpush1.bf16.msra.mxu0 %v293
    %307 = vmatprep.subr.bf16.mxu0 0
    %308 = vmatpush1.bf16.msra.mxu0 %v292
    %309 = vmatprep.subr.bf16.mxu0 0
    %310 = vmatpush1.bf16.msra.mxu0 %v291
    %311 = vmatprep.subr.bf16.mxu0 0
    %312 = vmatpush1.bf16.msra.mxu0 %v290
    %313 = vmatprep.subr.bf16.mxu0 0
    %314 = vmatpush1.bf16.msra.mxu0 %v289
    %315 = vmatprep.subr.bf16.mxu0 0
    %316 = vmatpush1.bf16.msra.mxu0 %v288
    %317 = vmatprep.subr.bf16.mxu0 0
    %318 = vmatpush1.bf16.msra.mxu0 %v287
    %319 = vmatprep.subr.bf16.mxu0 0
    %320 = vmatpush2.bf16.msra.mxu0 0
    %321 = vmatprep.subr.bf16.mxu0 0
    %322 = vmatpush2.bf16.msra.mxu0 0
    %323 = vmatprep.subr.bf16.mxu0 0
    %324 = vmatpush2.bf16.msra.mxu0 0
    %325 = vmatprep.subr.bf16.mxu0 0
    %326 = vmatpush2.bf16.msra.mxu0 0
    %327 = vmatprep.subr.bf16.mxu0 0
    %328 = vmatpush2.bf16.msra.mxu0 0
    %329 = vmatprep.subr.bf16.mxu0 0
    %330 = vmatpush2.bf16.msra.mxu0 0
    %331 = vmatprep.subr.bf16.mxu0 0
    %332 = vmatpush2.bf16.msra.mxu0 0
    %333 = vmatprep.subr.bf16.mxu0 0
    %334 = vmatpush2.bf16.msra.mxu0 0
    %335 = vmatprep.mubr.bf16.mxu0 0
    %336 = vmatmul.mubr.bf16.gmra.mxu0 %v238
    %v337 = vpop.f32.mrf.mxu0
    %v338 = vadd.f32 0.0, %v337
    %v339 = vpop.f32.mrf.mxu0
    %v340 = vpop.f32.mrf.mxu0
    %v341 = vadd.f32 0.0, %v340
    %v342 = vpop.f32.mrf.mxu0
    %343 = vdwg.mxu0
    %vm344 = vcmask 64512
    %345 = vst.msk [vmem:[%s6] sm:$0xff] %vm344, %v338
    %346 = vst.msk [vmem:[%s6 + $0x8] sm:$0xff] %vm344, %v341
    // Predicated region
    $region34: #{tpu_custom_call.1} parent=1 // pred_check
      _
    $region35: #{tpu_custom_call.1} parent=1 // pred_check_branch
      %348 = sbr.rel (0) target = $region37
    $region36: #{tpu_custom_call.1} parent=1 // pred_region
      _
    $region37: #{tpu_custom_call.1} parent=1 // pred_fallthru
      _
    // Predicated region
    $region38: #{tpu_custom_call.1} parent=1 // pred_check
      _
    $region39: #{tpu_custom_call.1} parent=1 // pred_check_branch
      %350 = sbr.rel (0) target = $region41
    $region40: #{tpu_custom_call.1} parent=1 // pred_region
      _
    $region41: #{tpu_custom_call.1} parent=1 // pred_fallthru
      _
    %351 = vsyncpa [#allocation3], 1
    %352 = vsyncpa [#allocation5], 1

// kernel: tpu_custom_call.1
$region0: #{tpu_custom_call.1}
  #allocation0 [shape = 'u32[]', space=smem, size = 0x4, offset = 0x4, fixed_abs, tag = 'smem constant byte address 0x4 - core index']
  #allocation1 [shape = 'u32[144,128]{1,0:T(1,128)}', space=vmem, size = 0x12000, scoped, tag = 'internal scratch']
  %s0 = inlined_call_operand.hbm [shape: f32[16,16], index: 0, kind: input, shape index: {}]
  %s1 = inlined_call_operand.vmem [shape: bf16[16,128], index: 1, kind: input, shape index: {}]
  %s2 = inlined_call_operand.vmem [shape: f32[1,128], index: 2, kind: input, shape index: {}]
  %s3 = inlined_call_operand.vmem [shape: bf16[128,128], index: 3, kind: input, shape index: {}]
  %s4 = inlined_call_operand.hbm [shape: f32[1,128], index: 4, kind: input, shape index: {}]
  %s5 = inlined_call_operand.vmem [shape: bf16[128,8], index: 5, kind: input, shape index: {}]
  %s6 = inlined_call_operand.vmem [shape: f32[16,8], index: 6, kind: output, shape index: {}]
  %s7 = sld [smem:[#allocation0]]
  $region42: #{tpu_custom_call.1} parent=0
    _
  %s9 = ssub.s32 1, %s7
  %s10 = scalar_select 0, %s9, %s7
  $region1: #{tpu_custom_call.1} parent=0
    #allocation2 [shape = 'u8[8192]{0}', space=vmem, size = 0x2000, scoped, tag = 'input window, operand 0, single buffered']
    #allocation3 [shape = 's32[1]{0}', space=sflag, size = 0x4, scoped, tag = 'scoped memory for tpu_custom_call.1']
    #allocation4 [shape = 'u8[512]{0}', space=vmem, size = 0x400, scoped, tag = 'input window, operand 4, single buffered']
    #allocation5 [shape = 's32[1]{0}', space=sflag, size = 0x4, scoped, tag = 'scoped memory for tpu_custom_call.1']
    %11 = vsyncpa [#allocation3], 0
    %12 = vsyncpa [#allocation5], 0
    // Predicated region
    $region2: #{tpu_custom_call.1} parent=1 // pred_check
      _
    $region3: #{tpu_custom_call.1} parent=1 // pred_check_branch
      %14 = sbr.rel (0) target = $region5
    $region4: #{tpu_custom_call.1} parent=1 // pred_region
      %s16 = ssub.s32 256, 256
      %17 = vsyncadd [#allocation3], %s16
      %s18 = sshll.u32 [#allocation2], 4
      %s19 = int_to_ptr.vmem [resolvable:$true] %s18
      %24 = dma.hbm_to_vmem [thread:$0]  %s0, 256, %s19, [#allocation3], 128, 128, 8
    $region5: #{tpu_custom_call.1} parent=1 // pred_fallthru
      _
    // Predicated region
    $region6: #{tpu_custom_call.1} parent=1 // pred_check
      _
    $region7: #{tpu_custom_call.1} parent=1 // pred_check_branch
      %26 = sbr.rel (0) target = $region9
    $region8: #{tpu_custom_call.1} parent=1 // pred_region
      _
    $region9: #{tpu_custom_call.1} parent=1 // pred_fallthru
      _
    // Predicated region
    $region10: #{tpu_custom_call.1} parent=1 // pred_check
      _
    $region11: #{tpu_custom_call.1} parent=1 // pred_check_branch
      %28 = sbr.rel (0) target = $region13
    $region12: #{tpu_custom_call.1} parent=1 // pred_region
      _
    $region13: #{tpu_custom_call.1} parent=1 // pred_fallthru
      _
    // Predicated region
    $region14: #{tpu_custom_call.1} parent=1 // pred_check
      _
    $region15: #{tpu_custom_call.1} parent=1 // pred_check_branch
      %30 = sbr.rel (0) target = $region17
    $region16: #{tpu_custom_call.1} parent=1 // pred_region
      _
    $region17: #{tpu_custom_call.1} parent=1 // pred_fallthru
      _
    // Predicated region
    $region18: #{tpu_custom_call.1} parent=1 // pred_check
      _
    $region19: #{tpu_custom_call.1} parent=1 // pred_check_branch
      %32 = sbr.rel (0) target = $region21
    $region20: #{tpu_custom_call.1} parent=1 // pred_region
      %s34 = ssub.s32 16, 16
      %35 = vsyncadd [#allocation5], %s34
      %s37 = sshll.u32 [#allocation4], 4
      %s38 = int_to_ptr.vmem [resolvable:$true] %s37
      %40 = dma.hbm_to_vmem [thread:$0]  %s4, 16, %s38, [#allocation5]
    $region21: #{tpu_custom_call.1} parent=1 // pred_fallthru
      _
    // Predicated region
    $region22: #{tpu_custom_call.1} parent=1 // pred_check
      _
    $region23: #{tpu_custom_call.1} parent=1 // pred_check_branch
      %42 = sbr.rel (0) target = $region25
    $region24: #{tpu_custom_call.1} parent=1 // pred_region
      _
    $region25: #{tpu_custom_call.1} parent=1 // pred_fallthru
      _
    // Predicated region
    $region26: #{tpu_custom_call.1} parent=1 // pred_check
      _
    $region27: #{tpu_custom_call.1} parent=1 // pred_check_branch
      %44 = sbr.rel (0) target = $region29
    $region28: #{tpu_custom_call.1} parent=1 // pred_region
      %45 = dma.done [#allocation3], 256
    $region29: #{tpu_custom_call.1} parent=1 // pred_fallthru
      _
    // Predicated region
    $region30: #{tpu_custom_call.1} parent=1 // pred_check
      _
    $region31: #{tpu_custom_call.1} parent=1 // pred_check_branch
      %47 = sbr.rel (0) target = $region33
    $region32: #{tpu_custom_call.1} parent=1 // pred_region
      %48 = dma.done [#allocation5], 16
    $region33: #{tpu_custom_call.1} parent=1 // pred_fallthru
      _
    %v50 = vld [vmem:[#allocation2] sm:$0xff]
    %v51 = vld [vmem:[#allocation2 + $0x8] sm:$0xff]
    %v52 = vpack.c.bf16 %v51, %v50
    %v53 = vld [vmem:[%s1] sm:$0xf]
    %v54 = vld [vmem:[%s1 + $0x4] sm:$0xf]
    %v55 = vld [vmem:[%s2] sm:$0x1]
    %v57 = vlaneseq
    %v58 = vshrl.u32 %v57, 7
    %v59 = vsub.s32 0, %v58
    %v60 = vrot.slane %v55, %v59
    %v64 = vunpack.c.l.b16 %v53
    %v65 = vunpack.c.l.b16 %v54
    %v66 = vpack.c.b16 %v65, %v64
    %vm68 = vcmask 130048
    %v70 = vsel %vm68, %v52, 0
    %72 = vmatprep.subr.bf16.mxu0 0
    %73 = vmatpush1.bf16.msra.mxu0 0
    %74 = vmatprep.subr.bf16.mxu0 0
    %75 = vmatpush1.bf16.msra.mxu0 0
    %76 = vmatprep.subr.bf16.mxu0 0
    %77 = vmatpush1.bf16.msra.mxu0 0
    %78 = vmatprep.subr.bf16.mxu0 0
    %79 = vmatpush1.bf16.msra.mxu0 0
    %80 = vmatprep.subr.bf16.mxu0 0
    %81 = vmatpush1.bf16.msra.mxu0 0
    %82 = vmatprep.subr.bf16.mxu0 0
    %83 = vmatpush1.bf16.msra.mxu0 0
    %84 = vmatprep.subr.bf16.mxu0 0
    %85 = vmatpush1.bf16.msra.mxu0 0
    %86 = vmatprep.subr.bf16.mxu0 0
    %87 = vmatpush1.bf16.msra.mxu0 %v66
    %88 = vmatprep.subr.bf16.mxu0 0
    %89 = vmatpush2.bf16.msra.mxu0 0
    %90 = vmatprep.subr.bf16.mxu0 0
    %91 = vmatpush2.bf16.msra.mxu0 0
    %92 = vmatprep.subr.bf16.mxu0 0
    %93 = vmatpush2.bf16.msra.mxu0 0
    %94 = vmatprep.subr.bf16.mxu0 0
    %95 = vmatpush2.bf16.msra.mxu0 0
    %96 = vmatprep.subr.bf16.mxu0 0
    %97 = vmatpush2.bf16.msra.mxu0 0
    %98 = vmatprep.subr.bf16.mxu0 0
    %99 = vmatpush2.bf16.msra.mxu0 0
    %100 = vmatprep.subr.bf16.mxu0 0
    %101 = vmatpush2.bf16.msra.mxu0 0
    %102 = vmatprep.subr.bf16.mxu0 0
    %103 = vmatpush2.bf16.msra.mxu0 0
    %104 = vmatprep.mubr.bf16.mxu0 0
    %105 = vmatmul.mubr.bf16.gmra.mxu0 %v70
    %v106 = vpop.f32.mrf.mxu0
    %v107 = vadd.f32 %v60, %v106
    %v108 = vpop.f32.mrf.mxu0
    %v109 = vpop.f32.mrf.mxu0
    %v110 = vadd.f32 %v60, %v109
    %v111 = vpop.f32.mrf.mxu0
    %112 = vdwg.mxu0
    %vm113 = vcmp.gt.f32.partialorder %v107, 0.0
    %vm114 = vcmp.gt.f32.partialorder %v110, 0.0
    %v115 = vmul.f32 %v107, 0.01
    %v116 = vmul.f32 %v110, 0.01
    %v117 = vsel %vm113, %v107, %v115
    %v118 = vsel %vm114, %v110, %v116
    %v119 = vpack.c.bf16 %v118, %v117
    %v120 = vld [vmem:[%s3] sm:$0xf]
    %v121 = vld [vmem:[%s3 + $0x4] sm:$0xf]
    %v122 = vld [vmem:[%s3 + $0x8] sm:$0xf]
    %v123 = vld [vmem:[%s3 + $0xc] sm:$0xf]
    %v124 = vld [vmem:[%s3 + $0x10] sm:$0xf]
    %v125 = vld [vmem:[%s3 + $0x14] sm:$0xf]
    %v126 = vld [vmem:[%s3 + $0x18] sm:$0xf]
    %v127 = vld [vmem:[%s3 + $0x1c] sm:$0xf]
    %v128 = vld [vmem:[%s3 + $0x20] sm:$0xf]
    %v129 = vld [vmem:[%s3 + $0x24] sm:$0xf]
    %v130 = vld [vmem:[%s3 + $0x28] sm:$0xf]
    %v131 = vld [vmem:[%s3 + $0x2c] sm:$0xf]
    %v132 = vld [vmem:[%s3 + $0x30] sm:$0xf]
    %v133 = vld [vmem:[%s3 + $0x34] sm:$0xf]
    %v134 = vld [vmem:[%s3 + $0x38] sm:$0xf]
    %v135 = vld [vmem:[%s3 + $0x3c] sm:$0xf]
    %v136 = vld [vmem:[#allocation4] sm:$0x1]
    %v138 = vlaneseq
    %v139 = vshrl.u32 %v138, 7
    %v140 = vsub.s32 0, %v139
    %v141 = vrot.slane %v136, %v140
    %v159 = vunpack.c.l.b16 %v120
    %v160 = vunpack.c.l.b16 %v121
    %v161 = vunpack.c.l.b16 %v122
    %v162 = vunpack.c.l.b16 %v123
    %v163 = vunpack.c.l.b16 %v124
    %v164 = vunpack.c.l.b16 %v125
    %v165 = vunpack.c.l.b16 %v126
    %v166 = vunpack.c.l.b16 %v127
    %v167 = vunpack.c.l.b16 %v128
    %v168 = vunpack.c.l.b16 %v129
    %v169 = vunpack.c.l.b16 %v130
    %v170 = vunpack.c.l.b16 %v131
    %v171 = vunpack.c.l.b16 %v132
    %v172 = vunpack.c.l.b16 %v133
    %v173 = vunpack.c.l.b16 %v134
    %v174 = vunpack.c.l.b16 %v135
    %v175 = vpack.c.b16 %v160, %v159
    %v176 = vpack.c.b16 %v162, %v161
    %v177 = vpack.c.b16 %v164, %v163
    %v178 = vpack.c.b16 %v166, %v165
    %v179 = vpack.c.b16 %v168, %v167
    %v180 = vpack.c.b16 %v170, %v169
    %v181 = vpack.c.b16 %v172, %v171
    %v182 = vpack.c.b16 %v174, %v173
    %191 = vmatprep.subr.bf16.mxu0 0
    %192 = vmatpush1.bf16.msra.mxu0 %v182
    %193 = vmatprep.subr.bf16.mxu0 0
    %194 = vmatpush1.bf16.msra.mxu0 %v181
    %195 = vmatprep.subr.bf16.mxu0 0
    %196 = vmatpush1.bf16.msra.mxu0 %v180
    %197 = vmatprep.subr.bf16.mxu0 0
    %198 = vmatpush1.bf16.msra.mxu0 %v179
    %199 = vmatprep.subr.bf16.mxu0 0
    %200 = vmatpush1.bf16.msra.mxu0 %v178
    %201 = vmatprep.subr.bf16.mxu0 0
    %202 = vmatpush1.bf16.msra.mxu0 %v177
    %203 = vmatprep.subr.bf16.mxu0 0
    %204 = vmatpush1.bf16.msra.mxu0 %v176
    %205 = vmatprep.subr.bf16.mxu0 0
    %206 = vmatpush1.bf16.msra.mxu0 %v175
    %207 = vmatprep.subr.bf16.mxu0 0
    %208 = vmatpush2.bf16.msra.mxu0 0
    %209 = vmatprep.subr.bf16.mxu0 0
    %210 = vmatpush2.bf16.msra.mxu0 0
    %211 = vmatprep.subr.bf16.mxu0 0
    %212 = vmatpush2.bf16.msra.mxu0 0
    %213 = vmatprep.subr.bf16.mxu0 0
    %214 = vmatpush2.bf16.msra.mxu0 0
    %215 = vmatprep.subr.bf16.mxu0 0
    %216 = vmatpush2.bf16.msra.mxu0 0
    %217 = vmatprep.subr.bf16.mxu0 0
    %218 = vmatpush2.bf16.msra.mxu0 0
    %219 = vmatprep.subr.bf16.mxu0 0
    %220 = vmatpush2.bf16.msra.mxu0 0
    %221 = vmatprep.subr.bf16.mxu0 0
    %222 = vmatpush2.bf16.msra.mxu0 0
    %223 = vmatprep.mubr.bf16.mxu0 0
    %224 = vmatmul.mubr.bf16.gmra.mxu0 %v119
    %v225 = vpop.f32.mrf.mxu0
    %v226 = vadd.f32 %v141, %v225
    %v227 = vpop.f32.mrf.mxu0
    %v228 = vpop.f32.mrf.mxu0
    %v229 = vadd.f32 %v141, %v228
    %v230 = vpop.f32.mrf.mxu0
    %231 = vdwg.mxu0
    %vm232 = vcmp.gt.f32.partialorder %v226, 0.0
    %vm233 = vcmp.gt.f32.partialorder %v229, 0.0
    %v234 = vmul.f32 %v226, 0.01
    %v235 = vmul.f32 %v229, 0.01
    %v236 = vsel %vm232, %v226, %v234
    %v237 = vsel %vm233, %v229, %v235
    %v238 = vpack.c.bf16 %v237, %v236
    %v239 = vld [vmem:[%s5] sm:$0xf]
    %v240 = vld [vmem:[%s5 + $0x4] sm:$0xf]
    %v241 = vld [vmem:[%s5 + $0x8] sm:$0xf]
    %v242 = vld [vmem:[%s5 + $0xc] sm:$0xf]
    %v243 = vld [vmem:[%s5 + $0x10] sm:$0xf]
    %v244 = vld [vmem:[%s5 + $0x14] sm:$0xf]
    %v245 = vld [vmem:[%s5 + $0x18] sm:$0xf]
    %v246 = vld [vmem:[%s5 + $0x1c] sm:$0xf]
    %v247 = vld [vmem:[%s5 + $0x20] sm:$0xf]
    %v248 = vld [vmem:[%s5 + $0x24] sm:$0xf]
    %v249 = vld [vmem:[%s5 + $0x28] sm:$0xf]
    %v250 = vld [vmem:[%s5 + $0x2c] sm:$0xf]
    %v251 = vld [vmem:[%s5 + $0x30] sm:$0xf]
    %v252 = vld [vmem:[%s5 + $0x34] sm:$0xf]
    %v253 = vld [vmem:[%s5 + $0x38] sm:$0xf]
    %v254 = vld [vmem:[%s5 + $0x3c] sm:$0xf]
    %v271 = vunpack.c.l.b16 %v239
    %v272 = vunpack.c.l.b16 %v240
    %v273 = vunpack.c.l.b16 %v241
    %v274 = vunpack.c.l.b16 %v242
    %v275 = vunpack.c.l.b16 %v243
    %v276 = vunpack.c.l.b16 %v244
    %v277 = vunpack.c.l.b16 %v245
    %v278 = vunpack.c.l.b16 %v246
    %v279 = vunpack.c.l.b16 %v247
    %v280 = vunpack.c.l.b16 %v248
    %v281 = vunpack.c.l.b16 %v249
    %v282 = vunpack.c.l.b16 %v250
    %v283 = vunpack.c.l.b16 %v251
    %v284 = vunpack.c.l.b16 %v252
    %v285 = vunpack.c.l.b16 %v253
    %v286 = vunpack.c.l.b16 %v254
    %v287 = vpack.c.b16 %v272, %v271
    %v288 = vpack.c.b16 %v274, %v273
    %v289 = vpack.c.b16 %v276, %v275
    %v290 = vpack.c.b16 %v278, %v277
    %v291 = vpack.c.b16 %v280, %v279
    %v292 = vpack.c.b16 %v282, %v281
    %v293 = vpack.c.b16 %v284, %v283
    %v294 = vpack.c.b16 %v286, %v285
    %303 = vmatprep.subr.bf16.mxu0 0
    %304 = vmatpush1.bf16.msra.mxu0 %v294
    %305 = vmatprep.subr.bf16.mxu0 0
    %306 = vmatpush1.bf16.msra.mxu0 %v293
    %307 = vmatprep.subr.bf16.mxu0 0
    %308 = vmatpush1.bf16.msra.mxu0 %v292
    %309 = vmatprep.subr.bf16.mxu0 0
    %310 = vmatpush1.bf16.msra.mxu0 %v291
    %311 = vmatprep.subr.bf16.mxu0 0
    %312 = vmatpush1.bf16.msra.mxu0 %v290
    %313 = vmatprep.subr.bf16.mxu0 0
    %314 = vmatpush1.bf16.msra.mxu0 %v289
    %315 = vmatprep.subr.bf16.mxu0 0
    %316 = vmatpush1.bf16.msra.mxu0 %v288
    %317 = vmatprep.subr.bf16.mxu0 0
    %318 = vmatpush1.bf16.msra.mxu0 %v287
    %319 = vmatprep.subr.bf16.mxu0 0
    %320 = vmatpush2.bf16.msra.mxu0 0
    %321 = vmatprep.subr.bf16.mxu0 0
    %322 = vmatpush2.bf16.msra.mxu0 0
    %323 = vmatprep.subr.bf16.mxu0 0
    %324 = vmatpush2.bf16.msra.mxu0 0
    %325 = vmatprep.subr.bf16.mxu0 0
    %326 = vmatpush2.bf16.msra.mxu0 0
    %327 = vmatprep.subr.bf16.mxu0 0
    %328 = vmatpush2.bf16.msra.mxu0 0
    %329 = vmatprep.subr.bf16.mxu0 0
    %330 = vmatpush2.bf16.msra.mxu0 0
    %331 = vmatprep.subr.bf16.mxu0 0
    %332 = vmatpush2.bf16.msra.mxu0 0
    %333 = vmatprep.subr.bf16.mxu0 0
    %334 = vmatpush2.bf16.msra.mxu0 0
    %335 = vmatprep.mubr.bf16.mxu0 0
    %336 = vmatmul.mubr.bf16.gmra.mxu0 %v238
    %v337 = vpop.f32.mrf.mxu0
    %v338 = vadd.f32 0.0, %v337
    %v339 = vpop.f32.mrf.mxu0
    %v340 = vpop.f32.mrf.mxu0
    %v341 = vadd.f32 0.0, %v340
    %v342 = vpop.f32.mrf.mxu0
    %343 = vdwg.mxu0
    %vm344 = vcmask 64512
    %345 = vst.msk [vmem:[%s6] sm:$0xff] %vm344, %v338
    %346 = vst.msk [vmem:[%s6 + $0x8] sm:$0xff] %vm344, %v341
    // Predicated region
    $region34: #{tpu_custom_call.1} parent=1 // pred_check
      _
    $region35: #{tpu_custom_call.1} parent=1 // pred_check_branch
      %348 = sbr.rel (0) target = $region37
    $region36: #{tpu_custom_call.1} parent=1 // pred_region
      _
    $region37: #{tpu_custom_call.1} parent=1 // pred_fallthru
      _
    // Predicated region
    $region38: #{tpu_custom_call.1} parent=1 // pred_check
      _
    $region39: #{tpu_custom_call.1} parent=1 // pred_check_branch
      %350 = sbr.rel (0) target = $region41
    $region40: #{tpu_custom_call.1} parent=1 // pred_region
      _
    $region41: #{tpu_custom_call.1} parent=1 // pred_fallthru
      _
    %351 = vsyncpa [#allocation3], 1
    %352 = vsyncpa [#allocation5], 1

</llo_original>
